<compile_context>
chip_gen: v6e
topology: v6e:2x2x1
jax: 0.10.0
libtpu: 0.0.40
codegen_flags: <defaults>
</compile_context>

<pallas_src>
import jax
import jax.numpy as jnp
import numpy as np
from jax import lax
from jax.experimental import pallas as pl
from jax.experimental.pallas import tpu as pltpu

SMOOTH = 1.0
_LANE = 128
_MAX_TILE_LANES = 32768          # bounds the unrolled lane-chunk add tree (IR size)
_MAX_TILE_F32_BYTES = 4 << 20    # cap on the f32 working footprint of one tile
_VMEM_LIMIT_BYTES = 48 * 1024 * 1024


def _round_up(x, m):
    return -(-x // m) * m


def _spatial_tile(n, c, max_bytes=_MAX_TILE_F32_BYTES, max_lanes=_MAX_TILE_LANES):
    """Largest multiple of 128 dividing n (n % 128 == 0) under the f32 footprint cap."""
    assert n % _LANE == 0
    c_pad = max(8, _round_up(c, 8))                       # f32 sublane padding
    cap = (max_bytes // (4 * c_pad)) // _LANE * _LANE
    cap = max(_LANE, min(n, max_lanes, cap))
    best = _LANE
    t = _LANE
    while t <= cap:
        if n % t == 0:
            best = t
        t += _LANE
    return best


def _lane_partial_sum(v, tn):
    """(1, C, tn) -> (1, C, 128) via a tree of pure-VPU vreg adds (no XLU reduce)."""
    parts = [v[:, :, j * _LANE:(j + 1) * _LANE] for j in range(tn // _LANE)]
    while len(parts) > 1:
        nxt = [parts[i] + parts[i + 1] for i in range(0, len(parts) - 1, 2)]
        if len(parts) % 2:
            nxt.append(parts[-1])
        parts = nxt
    return parts[0]


def _dice_partial_kernel(num_classes, tile_n, tiles_per_split, valid_n, padded_n, onehot):
    C = num_classes
    TN = tile_n
    NT = tiles_per_split
    has_pad = padded_n != valid_n

    def kernel(pred_ref, tgt_ref, inter_ref, union_ref):
        s = pl.program_id(1)
        n = pl.program_id(2)

        @pl.when(n == 0)
        def _():
            inter_ref[...] = jnp.zeros_like(inter_ref)
            union_ref[...] = jnp.zeros_like(union_ref)

        x = pred_ref[...].astype(jnp.float32)             # (1, C, TN) logits

        # Numerically-stable softmax over the channel (sublane) axis.  One exact
        # reciprocal per pixel (EUP) then a cheap VPU multiply.
        m = jnp.max(x, axis=1, keepdims=True)
        e = jnp.exp(x - m)
        zinv = pl.reciprocal(jnp.sum(e, axis=1, keepdims=True), approx=False)
        p = e * zinv                                      # (1, C, TN)

        if onehot:
            t = tgt_ref[...].astype(jnp.float32)          # (1, C, TN) one-hot / soft
        else:
            lab = tgt_ref[...].astype(jnp.int32)          # (1, 1, TN) class ids
            # Minimal-shape class iota; the compare broadcasts it across lanes.
            cls = lax.broadcasted_iota(jnp.int32, (1, C, 1), 1)
            t = (cls == lab).astype(jnp.float32)          # (1, C, TN)

        if has_pad:
            # Only the last tile contains padded pixels; mask them out of both terms.
            pos = (s * NT + n) * TN + lax.broadcasted_iota(jnp.int32, (1, 1, TN), 2)
            valid = pos < valid_n
            p = jnp.where(valid, p, 0.0)
            t = jnp.where(valid, t, 0.0)

        # Lane-partial accumulation into the resident output blocks (pure VPU).
        inter_ref[...] += _lane_partial_sum(p * t, TN)    # Σ p·t   per channel
        union_ref[...] += _lane_partial_sum(p + t, TN)    # Σ(p+t)  (psum + tsum merged)

    return kernel


def _dice_per_class(pred, tgt, onehot, smooth):
    """Per-(b, c) (1 - dice) computed with the Pallas partial-sum kernel."""
    B, C = pred.shape[0], pred.shape[1]
    N = 1
    for d in pred.shape[2:]:
        N *= d

    pred_f = pred.reshape(B, C, N)                        # keep caller dtype (cast in-kernel)
    if onehot:
        tgt_f = tgt.reshape(B, C, N)                      # one-hot / soft target, caller dtype
        tgt_c = C
    else:
        tgt_f = tgt.reshape(B, 1, N)                      # integer labels, caller int dtype
        tgt_c = 1

    # Pad the spatial axis to a multiple of 128; the tail is masked in-kernel.
    N_pad = _round_up(N, _LANE)
    if N_pad != N:
        pad = N_pad - N
        pred_f = jnp.pad(pred_f, ((0, 0), (0, 0), (0, pad)))
        tgt_f = jnp.pad(tgt_f, ((0, 0), (0, 0), (0, pad)))

    # Spatial split across TensorCores (v7x megacore) when the batch is too small.
    S = 2 if (B == 1 and (N_pad // _LANE) % 2 == 0 and N_pad >= 2 * _LANE) else 1
    N_split = N_pad // S
    TN = _spatial_tile(N_split, C)
    NT = N_split // TN
    grid = (B, S, NT)

    kernel = _dice_partial_kernel(C, TN, NT, N, N_pad, onehot)

    inter_out, union_out = pl.pallas_call(
        kernel,
        out_shape=(jax.ShapeDtypeStruct((B * S, C, _LANE), jnp.float32),
                   jax.ShapeDtypeStruct((B * S, C, _LANE), jnp.float32)),
        grid_spec=pltpu.PrefetchScalarGridSpec(
            num_scalar_prefetch=0,
            grid=grid,
            in_specs=[
                pl.BlockSpec((1, C, TN), lambda b, s, n: (b, 0, s * NT + n)),
                pl.BlockSpec((1, tgt_c, TN), lambda b, s, n: (b, 0, s * NT + n)),
            ],
            out_specs=[
                pl.BlockSpec((1, C, _LANE), lambda b, s, n: (b * S + s, 0, 0)),
                pl.BlockSpec((1, C, _LANE), lambda b, s, n: (b * S + s, 0, 0)),
            ],
        ),
        compiler_params=pltpu.CompilerParams(
            dimension_semantics=("parallel", "parallel", "arbitrary"),
            vmem_limit_bytes=_VMEM_LIMIT_BYTES,
        ),
    )(pred_f, tgt_f)

    # Tiny final reduction in plain JAX: sum the spatial splits and the 128 lanes.
    inter = inter_out.reshape(B, S, C, _LANE).sum(axis=(1, 3))   # (B, C)
    union = union_out.reshape(B, S, C, _LANE).sum(axis=(1, 3))   # (B, C)
    dice = (2.0 * inter + smooth) / (union + smooth)
    return 1.0 - dice


def dice_loss(pred, target, smooth=SMOOTH):
    """Matches DiceLoss.forward: pred (B,C,H,W) logits, target (B,C,H,W) one-hot.

    The target is streamed directly into the kernel (inter = Σ p·t, union = Σ(p+t)),
    so soft / non-strict one-hot targets keep their exact module semantics and there
    is no extra argmax HBM pass.
    """
    return jnp.mean(_dice_per_class(pred, target, onehot=True, smooth=smooth))


def dice_loss_from_labels(pred, labels, smooth=SMOOTH):
    """Bandwidth-lean path: pred (B,C,H,W) logits, labels (B,H,W) integer class ids.

    The one-hot mask is rebuilt in VMEM from the label stream (kept in its caller
    integer dtype, e.g. int8/int32), roughly halving HBM traffic vs. one-hot input.
    """
    return jnp.mean(_dice_per_class(pred, labels, onehot=False, smooth=smooth))


def _reference_dice_loss(pred, target, smooth=SMOOTH):
    p = jax.nn.softmax(pred.astype(jnp.float32), axis=1)
    B, C = pred.shape[0], pred.shape[1]
    pf = p.reshape(B, C, -1)
    tf = target.astype(jnp.float32).reshape(B, C, -1)
    inter = jnp.sum(pf * tf, axis=-1)
    union = jnp.sum(pf, axis=-1) + jnp.sum(tf, axis=-1)
    dice = (2.0 * inter + smooth) / (union + smooth)
    return jnp.mean(1.0 - dice)


if __name__ == "__main__":
    key = jax.random.PRNGKey(0)
    k1, k2, k3, k4 = jax.random.split(key, 4)

    # Primary test: module-faithful one-hot interface, 128-aligned spatial size.
    B, C, H, W = 2, 4, 16, 16
    pred = jax.random.normal(k1, (B, C, H, W), dtype=jnp.float32)
    labels = jax.random.randint(k2, (B, H, W), 0, C)
    target = jax.nn.one_hot(labels, C, axis=1, dtype=jnp.float32)   # (B, C, H, W)

    loss_oh = dice_loss(pred, target)                 # one-hot streamed (module-faithful)
    loss_lbl = dice_loss_from_labels(pred, labels)    # bandwidth-lean label path
    jax.block_until_ready((loss_oh, loss_lbl))

    ref = _reference_dice_loss(pred, target)
    assert np.allclose(np.asarray(loss_oh), np.asarray(ref), rtol=1e-5, atol=1e-5), (loss_oh, ref)
    assert np.allclose(np.asarray(loss_lbl), np.asarray(ref), rtol=1e-5, atol=1e-5), (loss_lbl, ref)

    # Non-128-aligned spatial size: exercises wrapper padding + in-kernel tail mask.
    B2, C2, H2, W2 = 2, 5, 9, 9
    pred2 = jax.random.normal(k3, (B2, C2, H2, W2), dtype=jnp.float32)
    labels2 = jax.random.randint(k4, (B2, H2, W2), 0, C2)
    target2 = jax.nn.one_hot(labels2, C2, axis=1, dtype=jnp.float32)
    loss2 = dice_loss(pred2, target2)
    loss2_lbl = dice_loss_from_labels(pred2, labels2)
    jax.block_until_ready((loss2, loss2_lbl))
    ref2 = _reference_dice_loss(pred2, target2)
    assert np.allclose(np.asarray(loss2), np.asarray(ref2), rtol=1e-5, atol=1e-5), (loss2, ref2)
    assert np.allclose(np.asarray(loss2_lbl), np.asarray(ref2), rtol=1e-5, atol=1e-5), (loss2_lbl, ref2)

    # B == 1: exercises the spatial split across the two parallel grid slots (v7x megacore).
    loss3 = dice_loss(pred[:1], target[:1])
    jax.block_until_ready(loss3)
    ref3 = _reference_dice_loss(pred[:1], target[:1])
    assert np.allclose(np.asarray(loss3), np.asarray(ref3), rtol=1e-5, atol=1e-5), (loss3, ref3)

    print("KERNEL_OK")
</pallas_src>

<mosaic_0001>
module attributes {stable_mosaic.version = 11 : i64} {
  func.func @kernel(%arg0: i32, %arg1: i32, %arg2: i32, %arg3: memref<1x4x256xf32, #tpu.memory_space<vmem>>, %arg4: memref<1x4x256xf32, #tpu.memory_space<vmem>>, %arg5: memref<1x4x128xf32, #tpu.memory_space<vmem>>, %arg6: memref<1x4x128xf32, #tpu.memory_space<vmem>>) attributes {dimension_semantics = [#tpu.dimension_semantics<parallel>, #tpu.dimension_semantics<parallel>, #tpu.dimension_semantics<arbitrary>], iteration_bounds = array<i64: 2, 1, 1>, scalar_prefetch = 0 : i64, scratch_operands = 0 : i64, tpu.core_type = #tpu.core_type<tc>, window_params = [{transform_indices = @transform_0, window_bounds = array<i64: 1, 4, 256>}, {transform_indices = @transform_1, window_bounds = array<i64: 1, 4, 256>}, {transform_indices = @transform_2, window_bounds = array<i64: 1, 4, 128>}, {transform_indices = @transform_3, window_bounds = array<i64: 1, 4, 128>}]} {
    %c0_i32 = arith.constant 0 : i32
    %0 = arith.cmpi eq, %arg2, %c0_i32 : i32
    %1 = arith.extui %0 : i1 to i32
    %c0_i32_0 = arith.constant 0 : i32
    %2 = arith.cmpi ne, %1, %c0_i32_0 : i32
    scf.if %2 {
      %cst_19 = arith.constant 0.000000e+00 : f32
      %29 = vector.broadcast %cst_19 : f32 to vector<1x4x128xf32>
      %c0_20 = arith.constant 0 : index
      %c0_21 = arith.constant 0 : index
      %c0_22 = arith.constant 0 : index
      %30 = vector.load %arg5[%c0_20, %c0_21, %c0_22] : memref<1x4x128xf32, #tpu.memory_space<vmem>>, vector<1x4x128xf32>
      tpu.vector_store %arg5[%c0_20, %c0_21, %c0_22], %29 {strides = array<i32>} : memref<1x4x128xf32, #tpu.memory_space<vmem>>, vector<1x4x128xf32>,
      %cst_23 = arith.constant 0.000000e+00 : f32
      %31 = vector.broadcast %cst_23 : f32 to vector<1x4x128xf32>
      %c0_24 = arith.constant 0 : index
      %c0_25 = arith.constant 0 : index
      %c0_26 = arith.constant 0 : index
      %32 = vector.load %arg6[%c0_24, %c0_25, %c0_26] : memref<1x4x128xf32, #tpu.memory_space<vmem>>, vector<1x4x128xf32>
      tpu.vector_store %arg6[%c0_24, %c0_25, %c0_26], %31 {strides = array<i32>} : memref<1x4x128xf32, #tpu.memory_space<vmem>>, vector<1x4x128xf32>,
    } else {
    }
    %c0 = arith.constant 0 : index
    %c0_1 = arith.constant 0 : index
    %c0_2 = arith.constant 0 : index
    %3 = vector.load %arg3[%c0, %c0_1, %c0_2] : memref<1x4x256xf32, #tpu.memory_space<vmem>>, vector<1x4x256xf32>
    %cst = arith.constant dense<0xFF800000> : vector<1x256xf32>
    %4 = vector.multi_reduction <maximumf>, %3, %cst [1] : vector<1x4x256xf32> to vector<1x256xf32>
    %5 = vector.shape_cast %4 : vector<1x256xf32> to vector<1x1x256xf32>
    %6 = vector.broadcast %5 : vector<1x1x256xf32> to vector<1x4x256xf32>
    %7 = arith.subf %3, %6 : vector<1x4x256xf32>
    %8 = math.exp %7 : vector<1x4x256xf32>
    %cst_3 = arith.constant dense<0.000000e+00> : vector<1x256xf32>
    %9 = vector.multi_reduction <add>, %8, %cst_3 [1] : vector<1x4x256xf32> to vector<1x256xf32>
    %10 = vector.shape_cast %9 : vector<1x256xf32> to vector<1x1x256xf32>
    %11 = tpu.reciprocal %10 : vector<1x1x256xf32> -> vector<1x1x256xf32>
    %12 = vector.broadcast %11 : vector<1x1x256xf32> to vector<1x4x256xf32>
    %13 = arith.mulf %8, %12 : vector<1x4x256xf32>
    %c0_4 = arith.constant 0 : index
    %c0_5 = arith.constant 0 : index
    %c0_6 = arith.constant 0 : index
    %14 = vector.load %arg4[%c0_4, %c0_5, %c0_6] : memref<1x4x256xf32, #tpu.memory_space<vmem>>, vector<1x4x256xf32>
    %c0_7 = arith.constant 0 : index
    %c0_8 = arith.constant 0 : index
    %c0_9 = arith.constant 0 : index
    %15 = vector.load %arg5[%c0_7, %c0_8, %c0_9] : memref<1x4x128xf32, #tpu.memory_space<vmem>>, vector<1x4x128xf32>
    %16 = arith.mulf %13, %14 : vector<1x4x256xf32>
    %17 = vector.extract_strided_slice %16 {offsets = [0, 0, 0], sizes = [1, 4, 128], strides = [1, 1, 1]} : vector<1x4x256xf32> to vector<1x4x128xf32>
    %18 = vector.extract_strided_slice %16 {offsets = [0, 0, 128], sizes = [1, 4, 128], strides = [1, 1, 1]} : vector<1x4x256xf32> to vector<1x4x128xf32>
    %19 = arith.addf %17, %18 : vector<1x4x128xf32>
    %20 = arith.addf %15, %19 : vector<1x4x128xf32>
    %c0_10 = arith.constant 0 : index
    %c0_11 = arith.constant 0 : index
    %c0_12 = arith.constant 0 : index
    %21 = vector.load %arg5[%c0_10, %c0_11, %c0_12] : memref<1x4x128xf32, #tpu.memory_space<vmem>>, vector<1x4x128xf32>
    tpu.vector_store %arg5[%c0_10, %c0_11, %c0_12], %20 {strides = array<i32>} : memref<1x4x128xf32, #tpu.memory_space<vmem>>, vector<1x4x128xf32>,
    %c0_13 = arith.constant 0 : index
    %c0_14 = arith.constant 0 : index
    %c0_15 = arith.constant 0 : index
    %22 = vector.load %arg6[%c0_13, %c0_14, %c0_15] : memref<1x4x128xf32, #tpu.memory_space<vmem>>, vector<1x4x128xf32>
    %23 = arith.addf %13, %14 : vector<1x4x256xf32>
    %24 = vector.extract_strided_slice %23 {offsets = [0, 0, 0], sizes = [1, 4, 128], strides = [1, 1, 1]} : vector<1x4x256xf32> to vector<1x4x128xf32>
    %25 = vector.extract_strided_slice %23 {offsets = [0, 0, 128], sizes = [1, 4, 128], strides = [1, 1, 1]} : vector<1x4x256xf32> to vector<1x4x128xf32>
    %26 = arith.addf %24, %25 : vector<1x4x128xf32>
    %27 = arith.addf %22, %26 : vector<1x4x128xf32>
    %c0_16 = arith.constant 0 : index
    %c0_17 = arith.constant 0 : index
    %c0_18 = arith.constant 0 : index
    %28 = vector.load %arg6[%c0_16, %c0_17, %c0_18] : memref<1x4x128xf32, #tpu.memory_space<vmem>>, vector<1x4x128xf32>
    tpu.vector_store %arg6[%c0_16, %c0_17, %c0_18], %27 {strides = array<i32>} : memref<1x4x128xf32, #tpu.memory_space<vmem>>, vector<1x4x128xf32>,
    return
  }
  func.func @transform_0(%arg0: i32, %arg1: i32, %arg2: i32) -> (i32, i32, i32) {
    %c1_i32 = arith.constant 1 : i32
    %0 = arith.muli %arg1, %c1_i32 : i32
    %1 = arith.addi %0, %arg2 : i32
    %c0_i32 = arith.constant 0 : i32
    %c0_i32_0 = arith.constant 0 : i32
    return %arg0, %c0_i32, %1 : i32, i32, i32
  }
  func.func @transform_1(%arg0: i32, %arg1: i32, %arg2: i32) -> (i32, i32, i32) {
    %c1_i32 = arith.constant 1 : i32
    %0 = arith.muli %arg1, %c1_i32 : i32
    %1 = arith.addi %0, %arg2 : i32
    %c0_i32 = arith.constant 0 : i32
    %c0_i32_0 = arith.constant 0 : i32
    return %arg0, %c0_i32, %1 : i32, i32, i32
  }
  func.func @transform_2(%arg0: i32, %arg1: i32, %arg2: i32) -> (i32, i32, i32) {
    %c1_i32 = arith.constant 1 : i32
    %0 = arith.muli %arg0, %c1_i32 : i32
    %1 = arith.addi %0, %arg1 : i32
    %c0_i32 = arith.constant 0 : i32
    %c0_i32_0 = arith.constant 0 : i32
    %c0_i32_1 = arith.constant 0 : i32
    return %1, %c0_i32, %c0_i32_0 : i32, i32, i32
  }
  func.func @transform_3(%arg0: i32, %arg1: i32, %arg2: i32) -> (i32, i32, i32) {
    %c1_i32 = arith.constant 1 : i32
    %0 = arith.muli %arg0, %c1_i32 : i32
    %1 = arith.addi %0, %arg1 : i32
    %c0_i32 = arith.constant 0 : i32
    %c0_i32_0 = arith.constant 0 : i32
    %c0_i32_1 = arith.constant 0 : i32
    return %1, %c0_i32, %c0_i32_0 : i32, i32, i32
  }
}

</mosaic_0001>

<llo_original>
// kernel: tpu_custom_call.1
$region0: #{tpu_custom_call.1}
  #allocation0 [shape = 'u32[]', space=smem, size = 0x4, offset = 0x4, fixed_abs, tag = 'smem constant byte address 0x4 - core index']
  #allocation1 [shape = 'u32[144,128]{1,0:T(1,128)}', space=vmem, size = 0x12000, scoped, tag = 'internal scratch']
  %s0 = inlined_call_operand.hbm [shape: f32[2,4,256], index: 0, kind: input, shape index: {}]
  %s1 = inlined_call_operand.hbm [shape: f32[2,4,256], index: 1, kind: input, shape index: {}]
  %s2 = inlined_call_operand.hbm [shape: f32[2,4,128], index: 2, kind: output, shape index: {0}]
  %s3 = inlined_call_operand.hbm [shape: f32[2,4,128], index: 3, kind: output, shape index: {1}]
  %4 = xla_tuple %s2, %s3
  %s5 = sld [smem:[#allocation0]]
  $region61: #{tpu_custom_call.1} parent=0
    _
  %s7 = ssub.s32 1, %s5
  %s8 = scalar_select 0, %s7, %s5
  $region1: #{tpu_custom_call.1} parent=0
    #allocation2 [shape = 'u8[8192]{0}', space=vmem, size = 0x2000, scoped, tag = 'input window, operand 0']
    #allocation3 [shape = 's32[2]{0}', space=sflag, size = 0x8, scoped, tag = 'scoped memory for tpu_custom_call.1']
    #allocation4 [shape = 's32[2]{0}', space=sflag, size = 0x8, scoped, tag = 'scoped memory for tpu_custom_call.1']
    #allocation5 [shape = 'u8[8192]{0}', space=vmem, size = 0x2000, scoped, tag = 'input window, operand 1']
    #allocation6 [shape = 's32[2]{0}', space=sflag, size = 0x8, scoped, tag = 'scoped memory for tpu_custom_call.1']
    #allocation7 [shape = 'u8[4096]{0}', space=vmem, size = 0x1000, scoped, tag = 'output window, operand 0']
    #allocation8 [shape = 'u8[4096]{0}', space=vmem, size = 0x1000, scoped, tag = 'output window, operand 1']
    #allocation9 [shape = 's32[2]{0}', space=sflag, size = 0x8, scoped, tag = 'scoped memory for tpu_custom_call.1']
    %9 = vsyncpa [#allocation3], 0
    %s10 = scalar_lea.sflag [#allocation3], 1
    %11 = vsyncpa %s10, 0
    %12 = vsyncpa [#allocation6], 0
    %s13 = scalar_lea.sflag [#allocation6], 1
    %14 = vsyncpa %s13, 0
    %15 = vsyncpa [#allocation4], 0
    %s16 = scalar_lea.sflag [#allocation4], 1
    %17 = vsyncpa %s16, 0
    %18 = vsyncpa [#allocation9], 0
    %s19 = scalar_lea.sflag [#allocation9], 1
    %20 = vsyncpa %s19, 0
    loop: start=0, step=1, limit=4
    $region2: #{tpu_custom_call.1} parent=1 // loop_pre_header
      _
    $region3: #{tpu_custom_call.1} parent=1 // loop_header
      %s22 = sphi 0, %s26
      %p23 = scmp.ge.s32.totalorder %s22, 4
      %s29 = sphi 0, %s48
      %s30 = sphi 0, %s44
      %s31 = sphi 0, %s40
      %s32 = sphi 0, %s29
      %s33 = sphi 0, %s30
      %s34 = sphi 0, %s31
      %s35 = sphi 0, %s32
      %s36 = sphi 0, %s33
      %s37 = sphi 0, %s34
      %s55 = sphi 0, %s57
      %s58 = sphi 0, %s55
      %s59 = sphi 0, %s58
      %s75 = sphi 0, %s59
      %s85 = sphi 0, %s87
      %s88 = sphi 0, %s85
      %s89 = sphi 0, %s88
      %s105 = sphi 0, %s89
      %s113 = sphi 0, %s115
      %s116 = sphi 0, %s113
      %s117 = sphi 0, %s116
      %s133 = sphi 0, %s117
      %s141 = sphi 0, %s143
      %s144 = sphi 0, %s141
      %s145 = sphi 0, %s144
      %s161 = sphi 0, %s145
    $region4: #{tpu_custom_call.1} parent=1 // loop_header_branch
      %25 = sbr.rel (%p23) target = $region8
    $region5: #{tpu_custom_call.1} parent=1 // loop_body
      %s27 = ssub.s32 %s22, 1
      %s28 = ssub.s32 %s22, 2
      %s38 = sadd.s32 1, %s31
      %p39 = scmp.ge.s32.totalorder %s38, 1
      %s40 = scalar_select %p39, 0, %s38
      %s41 = sadd.s32 1, %s30
      %s42 = scalar_select %p39, %s41, %s30
      %p43 = scmp.ge.s32.totalorder %s42, 1
      %s44 = scalar_select %p43, 0, %s42
      %s45 = sadd.s32 1, %s29
      %s46 = scalar_select %p43, %s45, %s29
      %p47 = scmp.ge.s32.totalorder %s46, 2
      %s48 = scalar_select %p47, 0, %s46
      %s49 = sadd.s32 %s30, %s31
      %s50 = sadd.s32 %s44, %s40
      %s51 = ssub.s32 %s29, %s48
      %s52 = ssub.s32 %s49, %s50
      %s53 = sor.u32 %s51, %s52
      %p54 = scmp.eq.s32.totalorder %s53, 0
      %s56 = sadd.s32 %s55, 1
      %s57 = scalar_select %p54, %s55, %s56
      %p60 = pneg %p54
      %p61 = scmp.eq.s32.totalorder %s22, 1
      %p62 = por %p60, %p61
      %p63 = scmp.ne.s32.totalorder %s55, %s58
      %p64 = scmp.eq.s32.totalorder %s22, 0
      %p65 = por %p63, %p64
      %p66 = scmp.ne.s32.totalorder %s55, %s58
      %p67 = scmp.eq.s32.totalorder %s27, 1
      %p68 = por %p66, %p67
      %p69 = scmp.ne.s32.totalorder %s58, %s59
      %p70 = scmp.eq.s32.totalorder %s27, 0
      %p71 = por %p69, %p70
      %p72 = scmp.ne.s32.totalorder %s58, %s59
      %p73 = scmp.eq.s32.totalorder %s28, 1
      %p74 = por %p72, %p73
      %p76 = scmp.ne.s32.totalorder %s59, %s75
      %p77 = scmp.eq.s32.totalorder %s28, 0
      %p78 = por %p76, %p77
      %s79 = sadd.s32 %s30, %s31
      %s80 = sadd.s32 %s44, %s40
      %s81 = ssub.s32 %s29, %s48
      %s82 = ssub.s32 %s79, %s80
      %s83 = sor.u32 %s81, %s82
      %p84 = scmp.eq.s32.totalorder %s83, 0
      %s86 = sadd.s32 %s85, 1
      %s87 = scalar_select %p84, %s85, %s86
      %p90 = pneg %p84
      %p91 = scmp.eq.s32.totalorder %s22, 1
      %p92 = por %p90, %p91
      %p93 = scmp.ne.s32.totalorder %s85, %s88
      %p94 = scmp.eq.s32.totalorder %s22, 0
      %p95 = por %p93, %p94
      %p96 = scmp.ne.s32.totalorder %s85, %s88
      %p97 = scmp.eq.s32.totalorder %s27, 1
      %p98 = por %p96, %p97
      %p99 = scmp.ne.s32.totalorder %s88, %s89
      %p100 = scmp.eq.s32.totalorder %s27, 0
      %p101 = por %p99, %p100
      %p102 = scmp.ne.s32.totalorder %s88, %s89
      %p103 = scmp.eq.s32.totalorder %s28, 1
      %p104 = por %p102, %p103
      %p106 = scmp.ne.s32.totalorder %s89, %s105
      %p107 = scmp.eq.s32.totalorder %s28, 0
      %p108 = por %p106, %p107
      %s109 = sadd.s32 %s29, %s30
      %s110 = sadd.s32 %s48, %s44
      %s111 = ssub.s32 %s109, %s110
      %p112 = scmp.eq.s32.totalorder %s111, 0
      %s114 = sadd.s32 %s113, 1
      %s115 = scalar_select %p112, %s113, %s114
      %p118 = pneg %p112
      %p119 = scmp.eq.s32.totalorder %s22, 1
      %p120 = por %p118, %p119
      %p121 = scmp.ne.s32.totalorder %s113, %s116
      %p122 = scmp.eq.s32.totalorder %s22, 0
      %p123 = por %p121, %p122
      %p124 = scmp.ne.s32.totalorder %s113, %s116
      %p125 = scmp.eq.s32.totalorder %s27, 1
      %p126 = por %p124, %p125
      %p127 = scmp.ne.s32.totalorder %s116, %s117
      %p128 = scmp.eq.s32.totalorder %s27, 0
      %p129 = por %p127, %p128
      %p130 = scmp.ne.s32.totalorder %s116, %s117
      %p131 = scmp.eq.s32.totalorder %s28, 1
      %p132 = por %p130, %p131
      %p134 = scmp.ne.s32.totalorder %s117, %s133
      %p135 = scmp.eq.s32.totalorder %s28, 0
      %p136 = por %p134, %p135
      %s137 = sadd.s32 %s29, %s30
      %s138 = sadd.s32 %s48, %s44
      %s139 = ssub.s32 %s137, %s138
      %p140 = scmp.eq.s32.totalorder %s139, 0
      %s142 = sadd.s32 %s141, 1
      %s143 = scalar_select %p140, %s141, %s142
      %p146 = pneg %p140
      %p147 = scmp.eq.s32.totalorder %s22, 1
      %p148 = por %p146, %p147
      %p149 = scmp.ne.s32.totalorder %s141, %s144
      %p150 = scmp.eq.s32.totalorder %s22, 0
      %p151 = por %p149, %p150
      %p152 = scmp.ne.s32.totalorder %s141, %s144
      %p153 = scmp.eq.s32.totalorder %s27, 1
      %p154 = por %p152, %p153
      %p155 = scmp.ne.s32.totalorder %s144, %s145
      %p156 = scmp.eq.s32.totalorder %s27, 0
      %p157 = por %p155, %p156
      %p158 = scmp.ne.s32.totalorder %s144, %s145
      %p159 = scmp.eq.s32.totalorder %s28, 1
      %p160 = por %p158, %p159
      %p162 = scmp.ne.s32.totalorder %s145, %s161
      %p163 = scmp.eq.s32.totalorder %s28, 0
      %p164 = por %p162, %p163
      %p165 = scmp.le.s32.totalorder 1, %s22
      %p166 = scmp.lt.s32.totalorder %s22, 3
      %p167 = pnand %p165, %p166
      %p168 = pneg %p167
      // Predicated region
      $region9: #{tpu_custom_call.1} parent=5 // pred_check
        _
      $region10: #{tpu_custom_call.1} parent=5 // pred_check_branch
        %170 = sbr.rel (%p167) target = $region12
      $region11: #{tpu_custom_call.1} parent=5 // pred_region
        %s171 = ssub.s32 %s22, 1
      $region12: #{tpu_custom_call.1} parent=5 // pred_fallthru
        _
      %p172 = scmp.lt.s32.totalorder %s22, 2
      // Predicated region
      $region13: #{tpu_custom_call.1} parent=5 // pred_check
        %p173 = pneg %p172
      $region14: #{tpu_custom_call.1} parent=5 // pred_check_branch
        %175 = sbr.rel (%p173) target = $region16
      $region15: #{tpu_custom_call.1} parent=5 // pred_region
        // Predicated region
        $region17: #{tpu_custom_call.1} parent=15 // pred_check
          %p176 = pneg %p65
        $region18: #{tpu_custom_call.1} parent=15 // pred_check_branch
          %178 = sbr.rel (%p176) target = $region20
        $region19: #{tpu_custom_call.1} parent=15 // pred_region
          %s179 = sand.u32 %s55, 1
          %s180 = scalar_lea.sflag [#allocation3], %s179
          %s181 = sand.u32 %s55, 1
          %s182 = smul.addr %s181, 8
          %s183 = scalar_lea.vmem [#allocation2], %s182
          %s184 = sadd.s32 %s30, %s31
          %s185 = smul.u32 2, %s184
          %s187 = ssub.s32 128, 128
          %188 = vsyncadd %s180, %s187
          %s189 = smul.addr %s29, 2
          %s190 = sadd.s32 %s185, %s189
          %s191 = smul.addr %s190, 64
          %s192 = scalar_lea.hbm %s0, %s191
          %s194 = sshll.u32 %s183, 4
          %s195 = int_to_ptr.vmem [resolvable:$true] %s194
          %197 = dma.hbm_to_vmem [thread:$0]  %s192, 128, %s195, %s180
        $region20: #{tpu_custom_call.1} parent=15 // pred_fallthru
          _
        // Predicated region
        $region21: #{tpu_custom_call.1} parent=15 // pred_check
          %p198 = pneg %p95
        $region22: #{tpu_custom_call.1} parent=15 // pred_check_branch
          %200 = sbr.rel (%p198) target = $region24
        $region23: #{tpu_custom_call.1} parent=15 // pred_region
          %s201 = sand.u32 %s85, 1
          %s202 = scalar_lea.sflag [#allocation6], %s201
          %s203 = sand.u32 %s85, 1
          %s204 = smul.addr %s203, 8
          %s205 = scalar_lea.vmem [#allocation5], %s204
          %s206 = sadd.s32 %s30, %s31
          %s207 = smul.u32 2, %s206
          %s209 = ssub.s32 128, 128
          %210 = vsyncadd %s202, %s209
          %s211 = smul.addr %s29, 2
          %s212 = sadd.s32 %s207, %s211
          %s213 = smul.addr %s212, 64
          %s214 = scalar_lea.hbm %s1, %s213
          %s216 = sshll.u32 %s205, 4
          %s217 = int_to_ptr.vmem [resolvable:$true] %s216
          %219 = dma.hbm_to_vmem [thread:$0]  %s214, 128, %s217, %s202
        $region24: #{tpu_custom_call.1} parent=15 // pred_fallthru
          _
      $region16: #{tpu_custom_call.1} parent=5 // pred_fallthru
        _
      %p220 = scmp.le.s32.totalorder 1, %s22
      %p221 = scmp.lt.s32.totalorder %s22, 3
      %p222 = pnand %p220, %p221
      %p223 = pneg %p222
      // Predicated region
      $region25: #{tpu_custom_call.1} parent=5 // pred_check
        _
      $region26: #{tpu_custom_call.1} parent=5 // pred_check_branch
        %225 = sbr.rel (%p222) target = $region28
      $region27: #{tpu_custom_call.1} parent=5 // pred_region
        %s226 = ssub.s32 %s22, 1
        %s227 = sand.u32 %s58, 1
        %s228 = scalar_lea.sflag [#allocation3], %s227
        %s229 = sand.u32 %s58, 1
        %s230 = smul.addr %s229, 8
        %s231 = scalar_lea.vmem [#allocation2], %s230
        // Predicated region
        $region29: #{tpu_custom_call.1} parent=27 // pred_check
          %p232 = pneg %p71
        $region30: #{tpu_custom_call.1} parent=27 // pred_check_branch
          %234 = sbr.rel (%p232) target = $region32
        $region31: #{tpu_custom_call.1} parent=27 // pred_region
          %235 = dma.done %s228, 128
        $region32: #{tpu_custom_call.1} parent=27 // pred_fallthru
          _
        %s236 = sand.u32 %s88, 1
        %s237 = scalar_lea.sflag [#allocation6], %s236
        %s238 = sand.u32 %s88, 1
        %s239 = smul.addr %s238, 8
        %s240 = scalar_lea.vmem [#allocation5], %s239
        // Predicated region
        $region33: #{tpu_custom_call.1} parent=27 // pred_check
          %p241 = pneg %p101
        $region34: #{tpu_custom_call.1} parent=27 // pred_check_branch
          %243 = sbr.rel (%p241) target = $region36
        $region35: #{tpu_custom_call.1} parent=27 // pred_region
          %244 = dma.done %s237, 128
        $region36: #{tpu_custom_call.1} parent=27 // pred_fallthru
          _
        %s245 = sand.u32 %s58, 1
        %s246 = scalar_lea.sflag [#allocation3], %s245
        %s247 = sand.u32 %s58, 1
        %s248 = smul.addr %s247, 8
        %s249 = scalar_lea.vmem [#allocation2], %s248
        %p250 = pneg %p71
        %p251 = pneg %p68
        %s252 = sand.u32 %s88, 1
        %s253 = scalar_lea.sflag [#allocation6], %s252
        %s254 = sand.u32 %s88, 1
        %s255 = smul.addr %s254, 8
        %s256 = scalar_lea.vmem [#allocation5], %s255
        %p257 = pneg %p101
        %p258 = pneg %p98
        %p259 = pneg %p129
        %p260 = pneg %p126
        %s261 = sand.u32 %s116, 1
        %s262 = scalar_lea.sflag [#allocation4], %s261
        %s263 = sand.u32 %s116, 1
        %s264 = smul.addr %s263, 4
        %s265 = scalar_lea.vmem [#allocation7], %s264
        %p266 = pneg %p157
        %p267 = pneg %p154
        %s268 = sand.u32 %s144, 1
        %s269 = scalar_lea.sflag [#allocation9], %s268
        %s270 = sand.u32 %s144, 1
        %s271 = smul.addr %s270, 4
        %s272 = scalar_lea.vmem [#allocation8], %s271
        %s273 = sadd.s32 %s33, %s34
        %s274 = smul.u32 2, %s273
        %s275 = sadd.s32 %s33, %s34
        %s276 = smul.u32 2, %s275
        %s277 = sadd.s32 %s32, %s33
        %s278 = sadd.s32 %s32, %s33
        %p279 = scmp.eq.s32.totalorder %s34, 0
        // Predicated region
        $region37: #{tpu_custom_call.1} parent=27 // pred_check
          %p280 = pneg %p279
        $region38: #{tpu_custom_call.1} parent=27 // pred_check_branch
          %282 = sbr.rel (%p280) target = $region40
        $region39: #{tpu_custom_call.1} parent=27 // pred_region
          %283 = vst [vmem:[%s265] sm:$0xf] 0.0
          %284 = vst [vmem:[%s272] sm:$0xf] 0.0
        $region40: #{tpu_custom_call.1} parent=27 // pred_fallthru
          _
        %v285 = vld [vmem:[%s231] sm:$0xff]
        %v287 = vcombine.high %v285, %v285
        %vm289 = vcmask 1043456
        %v290 = vsel %vm289, %v285, -inf
        %v291 = vrot.slane %v290, 4
        %v292 = vmax.f32 %v290, %v291
        %v293 = vrot.slane %v292, 2
        %v294 = vmax.f32 %v292, %v293
        %v295 = vrot.slane %v294, 1
        %v296 = vmax.f32 %v294, %v295
        %v297 = vsel %vm289, %v287, -inf
        %v298 = vrot.slane %v297, 4
        %v299 = vmax.f32 %v297, %v298
        %v300 = vrot.slane %v299, 2
        %v301 = vmax.f32 %v299, %v300
        %v302 = vrot.slane %v301, 1
        %v303 = vmax.f32 %v301, %v302
        %v306 = vcombine.low %v296, %v303
        %v308 = vsub.f32 %v285, %v306
        %v309 = vmul.f32 %v308, 1.442695
        %v310 = vpow.pop %v309
        %v312 = vcombine.high %v310, %v310
        %v314 = vsel %vm289, %v310, 0.0
        %v315 = vrot.slane %v314, 4
        %v316 = vadd.f32 %v314, %v315
        %v317 = vrot.slane %v316, 2
        %v318 = vadd.f32 %v316, %v317
        %v319 = vrot.slane %v318, 1
        %v320 = vadd.f32 %v318, %v319
        %v321 = vsel %vm289, %v312, 0.0
        %v322 = vrot.slane %v321, 4
        %v323 = vadd.f32 %v321, %v322
        %v324 = vrot.slane %v323, 2
        %v325 = vadd.f32 %v323, %v324
        %v326 = vrot.slane %v325, 1
        %v327 = vadd.f32 %v325, %v326
        %v328 = vrcp.pop %v320
        %v329 = vrcp.pop %v327
        %v332 = vcombine.low %v328, %v329
        %v334 = vmul.f32 %v310, %v332
        %v335 = vld [vmem:[%s240] sm:$0xff]
        %v336 = vld [vmem:[%s265] sm:$0xf]
        %v337 = vmul.f32 %v334, %v335
        %v339 = vrot.slane %v337, 4
        %v341 = vadd.f32 %v337, %v339
        %v342 = vadd.f32 %v336, %v341
        %343 = vst [vmem:[%s265] sm:$0xf] %v342
        %v344 = vld [vmem:[%s272] sm:$0xf]
        %v345 = vadd.f32 %v334, %v335
        %v347 = vrot.slane %v345, 4
        %v349 = vadd.f32 %v345, %v347
        %v350 = vadd.f32 %v344, %v349
        %351 = vst [vmem:[%s272] sm:$0xf] %v350
        %s352 = sand.u32 %s116, 1
        %s353 = scalar_lea.sflag [#allocation4], %s352
        %s354 = sand.u32 %s116, 1
        %s355 = smul.addr %s354, 4
        %s356 = scalar_lea.vmem [#allocation7], %s355
        %s357 = sand.u32 %s144, 1
        %s358 = scalar_lea.sflag [#allocation9], %s357
        %s359 = sand.u32 %s144, 1
        %s360 = smul.addr %s359, 4
        %s361 = scalar_lea.vmem [#allocation8], %s360
        // Predicated region
        $region41: #{tpu_custom_call.1} parent=27 // pred_check
          %p362 = pneg %p126
        $region42: #{tpu_custom_call.1} parent=27 // pred_check_branch
          %364 = sbr.rel (%p362) target = $region44
        $region43: #{tpu_custom_call.1} parent=27 // pred_region
          %s365 = sadd.s32 %s32, %s33
          %s367 = ssub.s32 64, 64
          %368 = vsyncadd %s353, %s367
          %s369 = smul.addr %s365, 64
          %s370 = scalar_lea.hbm %s2, %s369
          %s372 = sshll.u32 %s356, 4
          %s373 = int_to_ptr.vmem [resolvable:$true] %s372
          %375 = dma.vmem_to_hbm [thread:$0]  %s373, 64, %s370, %s353
        $region44: #{tpu_custom_call.1} parent=27 // pred_fallthru
          _
        // Predicated region
        $region45: #{tpu_custom_call.1} parent=27 // pred_check
          %p376 = pneg %p154
        $region46: #{tpu_custom_call.1} parent=27 // pred_check_branch
          %378 = sbr.rel (%p376) target = $region48
        $region47: #{tpu_custom_call.1} parent=27 // pred_region
          %s379 = sadd.s32 %s32, %s33
          %s381 = ssub.s32 64, 64
          %382 = vsyncadd %s358, %s381
          %s383 = smul.addr %s379, 64
          %s384 = scalar_lea.hbm %s3, %s383
          %s386 = sshll.u32 %s361, 4
          %s387 = int_to_ptr.vmem [resolvable:$true] %s386
          %389 = dma.vmem_to_hbm [thread:$0]  %s387, 64, %s384, %s358
        $region48: #{tpu_custom_call.1} parent=27 // pred_fallthru
          _
      $region28: #{tpu_custom_call.1} parent=5 // pred_fallthru
        _
      %p390 = scmp.le.s32.totalorder 2, %s22
      // Predicated region
      $region49: #{tpu_custom_call.1} parent=5 // pred_check
        %p391 = pneg %p390
      $region50: #{tpu_custom_call.1} parent=5 // pred_check_branch
        %393 = sbr.rel (%p391) target = $region52
      $region51: #{tpu_custom_call.1} parent=5 // pred_region
        %s394 = ssub.s32 %s22, 2
        // Predicated region
        $region53: #{tpu_custom_call.1} parent=51 // pred_check
          %p395 = pneg %p132
        $region54: #{tpu_custom_call.1} parent=51 // pred_check_branch
          %397 = sbr.rel (%p395) target = $region56
        $region55: #{tpu_custom_call.1} parent=51 // pred_region
          %s398 = sand.u32 %s117, 1
          %s399 = scalar_lea.sflag [#allocation4], %s398
          %s400 = sand.u32 %s117, 1
          %s401 = smul.addr %s400, 4
          %s402 = scalar_lea.vmem [#allocation7], %s401
          %403 = dma.done %s399, 64
        $region56: #{tpu_custom_call.1} parent=51 // pred_fallthru
          _
        // Predicated region
        $region57: #{tpu_custom_call.1} parent=51 // pred_check
          %p404 = pneg %p160
        $region58: #{tpu_custom_call.1} parent=51 // pred_check_branch
          %406 = sbr.rel (%p404) target = $region60
        $region59: #{tpu_custom_call.1} parent=51 // pred_region
          %s407 = sand.u32 %s145, 1
          %s408 = scalar_lea.sflag [#allocation9], %s407
          %s409 = sand.u32 %s145, 1
          %s410 = smul.addr %s409, 4
          %s411 = scalar_lea.vmem [#allocation8], %s410
          %412 = dma.done %s408, 64
        $region60: #{tpu_custom_call.1} parent=51 // pred_fallthru
          _
      $region52: #{tpu_custom_call.1} parent=5 // pred_fallthru
        _
    $region6: #{tpu_custom_call.1} parent=1 // loop_footer
      %s26 = sadd.s32 1, %s22
    $region7: #{tpu_custom_call.1} parent=1 // loop_footer_branch
      %21 = sbr.rel target = $region3
    $region8: #{tpu_custom_call.1} parent=1 // loop_exit
      _
    %413 = vsyncpa [#allocation3], 1
    %s414 = scalar_lea.sflag [#allocation3], 1
    %415 = vsyncpa %s414, 1
    %416 = vsyncpa [#allocation6], 1
    %s417 = scalar_lea.sflag [#allocation6], 1
    %418 = vsyncpa %s417, 1
    %419 = vsyncpa [#allocation4], 1
    %s420 = scalar_lea.sflag [#allocation4], 1
    %421 = vsyncpa %s420, 1
    %422 = vsyncpa [#allocation9], 1
    %s423 = scalar_lea.sflag [#allocation9], 1
    %424 = vsyncpa %s423, 1

</llo_original>
